<compile_context>
chip_gen: v5e
topology: v5e:2x2
jax: 0.10.0
libtpu: 0.0.40
codegen_flags: <defaults>
</compile_context>

<pallas_src>
import functools

import jax
import jax.numpy as jnp
from jax.experimental import pallas as pl
from jax.experimental.pallas import tpu as pltpu


def local_attn_kernel(x_ref, wfg_ref, bf_ref, out_ref, *, nodes_per_graph):
    """One grid step: rows = G * N flattened node rows (G whole graphs)."""
    rows, _ = x_ref.shape
    f_plus_1 = wfg_ref.shape[1]
    feat_dim = f_plus_1 - 1
    n = nodes_per_graph
    g = rows // n

    # Single fused MXU matmul: columns [0, F) are feat_nn, column F is the
    # gate_nn logit.  bf16 inputs (cast HERE, not in the wrapper -> no extra
    # HBM pass over x), f32 accumulation.
    x_bf16 = x_ref[...].astype(jnp.bfloat16)
    acc = jnp.dot(x_bf16, wfg_ref[...], preferred_element_type=jnp.float32)  # (rows, F+1)

    feat = acc[:, :feat_dim] + bf_ref[...]   # (rows, F) f32
    gate = acc[:, feat_dim:]                 # (rows, 1) f32; gate bias is a
                                             # softmax-invariant no-op -> dropped

    # dgl.softmax_nodes: softmax over the N nodes of each graph.  Only this
    # tiny (rows, 1) column gets reshaped; the big feat tensor stays 2-D.
    gate3 = gate.reshape(g, n, 1)
    m = jnp.max(gate3, axis=1, keepdims=True)            # (G, 1, 1)
    e = jnp.exp(gate3 - m)                                # (G, N, 1)
    denom = jnp.sum(e, axis=1, keepdims=True)             # (G, 1, 1)
    w = (e * pl.reciprocal(denom, approx=True)).reshape(rows, 1)   # EUP reciprocal

    out_ref[...] = (feat * w).astype(out_ref.dtype)


def _vmem_limit_bytes():
    """Per-chip VMEM budget.  v7x TensorCores only have 64 MiB (vs 128 MiB on
    v5e/v6e), so only raise the limit when we positively identify a 128 MiB
    part; the conservative 48 MiB default is safe everywhere."""
    try:
        kind = jax.devices()[0].device_kind.lower()
    except Exception:
        kind = ""
    if "v5" in kind or "v6" in kind:
        return 96 * 1024 * 1024
    return 48 * 1024 * 1024


def _max_block_rows(inp_dim, feat_dim, vmem_limit):
    """Rows per block so the double-buffered pipeline + in-kernel temporaries
    stay comfortably inside the VMEM limit (lane-padded to 128)."""
    lane = 128
    x_row = max(inp_dim, lane) * 4                      # f32 input block row
    o_row = max(feat_dim, lane) * 4                     # f32 output block row
    tmp_row = (max(inp_dim, lane) * 2                   # in-kernel bf16 copy of x
               + max(feat_dim + 1, lane) * 4            # f32 matmul accumulator
               + max(feat_dim, lane) * 4)               # f32 biased feat temp
    per_row = 2 * x_row + 2 * o_row + tmp_row           # x2: I/O double-buffering
    budget = vmem_limit // 2                            # headroom for weights/compiler temps
    return max(8, budget // per_row)


def _pick_graphs_per_block(num_graphs, nodes_per_graph, max_rows):
    """Largest divisor G of num_graphs whose (G*N, D) block fits the VMEM row
    budget, preferring 4-16 grid steps (fetch/writeback overlap without paying
    ~0.35us/step overhead) and an even step count (v7x megacore balance)."""
    B, N = num_graphs, nodes_per_graph
    total_rows = B * N
    feasible = []
    for g in range(1, B + 1):
        rows = g * N
        if B % g != 0 or rows > max_rows:
            continue
        # Pallas (8,128) rule: block sublane dim must be a multiple of 8 unless
        # it spans the full row axis.
        if rows % 8 != 0 and rows != total_rows:
            continue
        feasible.append(g)
    if not feasible:
        return 1
    target_rows = min(512, max(g * N for g in feasible))

    def score(g):
        steps = B // g
        return (
            g * N >= target_rows,    # big tiles first: amortize per-step overhead
            4 <= steps <= 16,        # enough steps to overlap read & writeback
            steps % 2 == 0,          # balanced split across v7x's 2 TensorCores
            steps >= 2,
            g,                       # then the biggest tile
        )

    return max(feasible, key=score)


def local_attn(x, wg, bg, wf, bf, *, graphs_per_block=None, out_dtype=None):
    """x: (B, N, D) f32; wg: (D, 1); bg: (1, 1); wf: (D, F); bf: (1, F)."""
    B, N, D = x.shape
    F_ = wf.shape[1]
    del bg  # softmax over nodes is invariant to the per-graph-constant gate bias
    out_dtype = x.dtype if out_dtype is None else out_dtype

    vmem_limit = _vmem_limit_bytes()
    if graphs_per_block is None:
        graphs_per_block = _pick_graphs_per_block(
            B, N, _max_block_rows(D, F_, vmem_limit))
    G = graphs_per_block
    assert B % G == 0, "graphs_per_block must divide the number of graphs"
    rows = G * N

    # Weights are tiny -> fine to pre-pack/cast in the wrapper.  x stays f32 in
    # HBM and is cast to bf16 inside the kernel.
    wfg = jnp.concatenate([wf, wg.reshape(D, 1)], axis=1).astype(jnp.bfloat16)  # (D, F+1)
    bf_row = bf.reshape(1, F_).astype(jnp.float32)

    x_flat = x.reshape(B * N, D)   # free contiguous reshape -> sublane-dense blocks

    kernel = functools.partial(local_attn_kernel, nodes_per_graph=N)

    out_flat = pl.pallas_call(
        kernel,
        out_shape=jax.ShapeDtypeStruct((B * N, F_), out_dtype),
        grid_spec=pltpu.PrefetchScalarGridSpec(
            num_scalar_prefetch=0,
            grid=(B // G,),
            in_specs=[
                pl.BlockSpec((rows, D), lambda i: (i, 0)),      # G graphs of node rows
                pl.BlockSpec((D, F_ + 1), lambda i: (0, 0)),    # [feat | gate] weights
                pl.BlockSpec((1, F_), lambda i: (0, 0)),        # feat bias
            ],
            out_specs=pl.BlockSpec((rows, F_), lambda i: (i, 0)),
        ),
        compiler_params=pltpu.CompilerParams(
            dimension_semantics=("parallel",),
            vmem_limit_bytes=vmem_limit,
        ),
    )(x_flat, wfg, bf_row)

    return out_flat.reshape(B, N, F_)


def local_attn_reference(x, wg, bg, wf, bf):
    gate = jnp.einsum("bnd,do->bno", x, wg) + bg                    # (B, N, 1)
    feat = jnp.einsum("bnd,df->bnf", x, wf) + bf                    # (B, N, F)
    gate = jax.nn.softmax(gate, axis=1)                             # per-graph node softmax
    return feat * gate


if __name__ == "__main__":
    # 8 graphs, 8 nodes each, inp_dim=32, feat_dim=32.
    B, N, D, F_ = 8, 8, 32, 32

    key = jax.random.PRNGKey(0)
    kx, kwg, kbg, kwf, kbf = jax.random.split(key, 5)

    x = jax.random.normal(kx, (B, N, D), dtype=jnp.float32)
    wg = jax.random.normal(kwg, (D, 1), dtype=jnp.float32) * 0.1
    bg = jax.random.normal(kbg, (1, 1), dtype=jnp.float32) * 0.1
    wf = jax.random.normal(kwf, (D, F_), dtype=jnp.float32) * 0.1
    bf = jax.random.normal(kbf, (1, F_), dtype=jnp.float32) * 0.1

    ref = local_attn_reference(x, wg, bg, wf, bf)

    # Auto-tiled path (single large block at this toy size).
    out = jax.block_until_ready(local_attn(x, wg, bg, wf, bf))
    assert out.shape == ref.shape
    # Loose tolerance: kernel uses bf16 matmul inputs + approx EUP reciprocal,
    # reference is full f32.
    assert jnp.allclose(out, ref, atol=2e-2, rtol=2e-2), "mismatch vs reference (auto tile)"

    # Multi-step path (grid=(4,)) to also exercise the pipelined index_map.
    out_ms = jax.block_until_ready(local_attn(x, wg, bg, wf, bf, graphs_per_block=2))
    assert jnp.allclose(out_ms, ref, atol=2e-2, rtol=2e-2), "mismatch vs reference (multi-step)"

    print("KERNEL_OK")
</pallas_src>

<mosaic_0001>
module attributes {stable_mosaic.version = 11 : i64} {
  func.func @local_attn_kernel(%arg0: i32, %arg1: memref<64x32xf32, #tpu.memory_space<vmem>>, %arg2: memref<32x33xbf16, #tpu.memory_space<vmem>>, %arg3: memref<1x32xf32, #tpu.memory_space<vmem>>, %arg4: memref<64x32xf32, #tpu.memory_space<vmem>>) attributes {dimension_semantics = [#tpu.dimension_semantics<parallel>], iteration_bounds = array<i64: 1>, scalar_prefetch = 0 : i64, scratch_operands = 0 : i64, tpu.core_type = #tpu.core_type<tc>, window_params = [{transform_indices = @transform_0, window_bounds = array<i64: 64, 32>}, {pipeline_mode = #tpu.pipeline_mode<synchronous>, transform_indices = @transform_1, window_bounds = array<i64: 32, 33>}, {pipeline_mode = #tpu.pipeline_mode<synchronous>, transform_indices = @transform_2, window_bounds = array<i64: 1, 32>}, {transform_indices = @transform_3, window_bounds = array<i64: 64, 32>}]} {
    %c0 = arith.constant 0 : index
    %c0_0 = arith.constant 0 : index
    %0 = vector.load %arg1[%c0, %c0_0] : memref<64x32xf32, #tpu.memory_space<vmem>>, vector<64x32xf32>
    %1 = arith.truncf %0 : vector<64x32xf32> to vector<64x32xbf16>
    %c0_1 = arith.constant 0 : index
    %c0_2 = arith.constant 0 : index
    %2 = vector.load %arg2[%c0_1, %c0_2] : memref<32x33xbf16, #tpu.memory_space<vmem>>, vector<32x33xbf16>
    %cst = arith.constant dense<0.000000e+00> : vector<64x33xf32>
    %3 = tpu.matmul %1, %2, %cst {dimension_numbers = #tpu.dot_dimension_numbers<[1], [0], [0], [1], [0, 0, 1, 1], [], []>} : vector<64x32xbf16>, vector<32x33xbf16>, vector<64x33xf32> -> vector<64x33xf32>
    %4 = vector.extract_strided_slice %3 {offsets = [0, 0], sizes = [64, 32], strides = [1, 1]} : vector<64x33xf32> to vector<64x32xf32>
    %c0_3 = arith.constant 0 : index
    %c0_4 = arith.constant 0 : index
    %5 = vector.load %arg3[%c0_3, %c0_4] : memref<1x32xf32, #tpu.memory_space<vmem>>, vector<1x32xf32>
    %6 = vector.broadcast %5 : vector<1x32xf32> to vector<64x32xf32>
    %7 = arith.addf %4, %6 : vector<64x32xf32>
    %8 = vector.extract_strided_slice %3 {offsets = [0, 32], sizes = [64, 1], strides = [1, 1]} : vector<64x33xf32> to vector<64x1xf32>
    %9 = vector.shape_cast %8 : vector<64x1xf32> to vector<8x8x1xf32>
    %cst_5 = arith.constant dense<0xFF800000> : vector<8x1xf32>
    %10 = vector.multi_reduction <maximumf>, %9, %cst_5 [1] : vector<8x8x1xf32> to vector<8x1xf32>
    %11 = vector.shape_cast %10 : vector<8x1xf32> to vector<8x1x1xf32>
    %12 = vector.broadcast %11 : vector<8x1x1xf32> to vector<8x8x1xf32>
    %13 = arith.subf %9, %12 : vector<8x8x1xf32>
    %14 = math.exp %13 : vector<8x8x1xf32>
    %cst_6 = arith.constant dense<0.000000e+00> : vector<8x1xf32>
    %15 = vector.multi_reduction <add>, %14, %cst_6 [1] : vector<8x8x1xf32> to vector<8x1xf32>
    %16 = vector.shape_cast %15 : vector<8x1xf32> to vector<8x1x1xf32>
    %17 = tpu.reciprocal %16 {approx = true} : vector<8x1x1xf32> -> vector<8x1x1xf32>
    %18 = vector.broadcast %17 : vector<8x1x1xf32> to vector<8x8x1xf32>
    %19 = arith.mulf %14, %18 : vector<8x8x1xf32>
    %20 = vector.shape_cast %19 : vector<8x8x1xf32> to vector<64x1xf32>
    %21 = vector.broadcast %20 : vector<64x1xf32> to vector<64x32xf32>
    %22 = arith.mulf %7, %21 : vector<64x32xf32>
    %c0_7 = arith.constant 0 : index
    %c0_8 = arith.constant 0 : index
    %23 = vector.load %arg4[%c0_7, %c0_8] : memref<64x32xf32, #tpu.memory_space<vmem>>, vector<64x32xf32>
    tpu.vector_store %arg4[%c0_7, %c0_8], %22 {strides = array<i32>} : memref<64x32xf32, #tpu.memory_space<vmem>>, vector<64x32xf32>,
    return
  }
  func.func @transform_0(%arg0: i32) -> (i32, i32) {
    %c0_i32 = arith.constant 0 : i32
    %c0_i32_0 = arith.constant 0 : i32
    return %arg0, %c0_i32 : i32, i32
  }
  func.func @transform_1(%arg0: i32) -> (i32, i32) {
    %c0_i32 = arith.constant 0 : i32
    %c0_i32_0 = arith.constant 0 : i32
    %c0_i32_1 = arith.constant 0 : i32
    return %c0_i32, %c0_i32_0 : i32, i32
  }
  func.func @transform_2(%arg0: i32) -> (i32, i32) {
    %c0_i32 = arith.constant 0 : i32
    %c0_i32_0 = arith.constant 0 : i32
    %c0_i32_1 = arith.constant 0 : i32
    return %c0_i32, %c0_i32_0 : i32, i32
  }
  func.func @transform_3(%arg0: i32) -> (i32, i32) {
    %c0_i32 = arith.constant 0 : i32
    %c0_i32_0 = arith.constant 0 : i32
    return %arg0, %c0_i32 : i32, i32
  }
}

</mosaic_0001>

<llo_original>
// kernel: tpu_custom_call.1
$region0: #{tpu_custom_call.1}
  #allocation0 [shape = 'u32[]', space=smem, size = 0x4, offset = 0x4, fixed_abs, tag = 'smem constant byte address 0x4 - core index']
  #allocation1 [shape = 'u32[72,128]{1,0:T(1,128)}', space=vmem, size = 0x9000, scoped, tag = 'internal scratch']
  %s0 = inlined_call_operand.vmem [shape: f32[64,32], index: 0, kind: input, shape index: {}]
  %s1 = inlined_call_operand.vmem [shape: bf16[32,33], index: 1, kind: input, shape index: {}]
  %s2 = inlined_call_operand.vmem [shape: f32[1,32], index: 2, kind: input, shape index: {}]
  %s3 = inlined_call_operand.vmem [shape: f32[64,32], index: 3, kind: output, shape index: {}]
  %s4 = sld [smem:[#allocation0]]
  $region22: #{tpu_custom_call.1} parent=0
    _
  %s6 = ssub.s32 1, %s4
  %s7 = scalar_select 0, %s6, %s4
  // Predicated region
  $region2: #{tpu_custom_call.1} parent=0 // pred_check
    _
  $region3: #{tpu_custom_call.1} parent=0 // pred_check_branch
    %9 = sbr.rel (0) target = $region5
  $region4: #{tpu_custom_call.1} parent=0 // pred_region
    _
  $region5: #{tpu_custom_call.1} parent=0 // pred_fallthru
    _
  // Predicated region
  $region6: #{tpu_custom_call.1} parent=0 // pred_check
    _
  $region7: #{tpu_custom_call.1} parent=0 // pred_check_branch
    %11 = sbr.rel (0) target = $region9
  $region8: #{tpu_custom_call.1} parent=0 // pred_region
    _
  $region9: #{tpu_custom_call.1} parent=0 // pred_fallthru
    _
  // Predicated region
  $region10: #{tpu_custom_call.1} parent=0 // pred_check
    _
  $region11: #{tpu_custom_call.1} parent=0 // pred_check_branch
    %13 = sbr.rel (0) target = $region13
  $region12: #{tpu_custom_call.1} parent=0 // pred_region
    _
  $region13: #{tpu_custom_call.1} parent=0 // pred_fallthru
    _
  %v15 = vld [vmem:[%s0] sm:$0xff]
  %v16 = vld [vmem:[%s0 + $0x8] sm:$0xff]
  %v17 = vld [vmem:[%s0 + $0x10] sm:$0xff]
  %v18 = vld [vmem:[%s0 + $0x18] sm:$0xff]
  %v19 = vld [vmem:[%s0 + $0x20] sm:$0xff]
  %v20 = vld [vmem:[%s0 + $0x28] sm:$0xff]
  %v21 = vld [vmem:[%s0 + $0x30] sm:$0xff]
  %v22 = vld [vmem:[%s0 + $0x38] sm:$0xff]
  %v23 = vpack.c.bf16 %v16, %v15
  %v24 = vpack.c.bf16 %v18, %v17
  %v25 = vpack.c.bf16 %v20, %v19
  %v26 = vpack.c.bf16 %v22, %v21
  %v27 = vld [vmem:[%s1] sm:$0xf]
  %v28 = vld [vmem:[%s1 + $0x4] sm:$0xf]
  %v29 = vld [vmem:[%s1 + $0x8] sm:$0xf]
  %v30 = vld [vmem:[%s1 + $0xc] sm:$0xf]
  %v35 = vunpack.c.l.b16 %v27
  %v36 = vunpack.c.l.b16 %v28
  %v37 = vunpack.c.l.b16 %v29
  %v38 = vunpack.c.l.b16 %v30
  %v39 = vpack.c.b16 %v36, %v35
  %v40 = vpack.c.b16 %v38, %v37
  %vm43 = vcmask 261120
  %v45 = vsel %vm43, %v23, 0
  %v48 = vsel %vm43, %v24, 0
  %v51 = vsel %vm43, %v25, 0
  %v54 = vsel %vm43, %v26, 0
  %56 = vmatpush.bf16.msra.mxu0 0
  %57 = vmatpush.bf16.msra.mxu0 0
  %58 = vmatpush.bf16.msra.mxu0 0
  %59 = vmatpush.bf16.msra.mxu0 0
  %60 = vmatpush.bf16.msra.mxu0 0
  %61 = vmatpush.bf16.msra.mxu0 0
  %62 = vmatpush.bf16.msra.mxu0 %v40
  %63 = vmatpush.bf16.msra.mxu0 %v39
  %64 = vmatmul.bf16.gmra.mxu0 %v45
  %v65 = vpop.f32.mrf.mxu0
  %v66 = vadd.f32 0.0, %v65
  %v67 = vpop.f32.mrf.mxu0
  %v68 = vadd.f32 0.0, %v67
  %69 = vmatmul.bf16.gmra.mxu0 %v48
  %v70 = vpop.f32.mrf.mxu0
  %v71 = vadd.f32 0.0, %v70
  %v72 = vpop.f32.mrf.mxu0
  %v73 = vadd.f32 0.0, %v72
  %74 = vmatmul.bf16.gmra.mxu0 %v51
  %v75 = vpop.f32.mrf.mxu0
  %v76 = vadd.f32 0.0, %v75
  %v77 = vpop.f32.mrf.mxu0
  %v78 = vadd.f32 0.0, %v77
  %79 = vmatmul.bf16.gmra.mxu0 %v54
  %v80 = vpop.f32.mrf.mxu0
  %v81 = vadd.f32 0.0, %v80
  %v82 = vpop.f32.mrf.mxu0
  %v83 = vadd.f32 0.0, %v82
  %84 = vdwg.mxu0
  %v85 = vld [vmem:[%s2] sm:$0x1]
  %v87 = vperm.slane %v85, 0
  %v89 = vadd.f32 %v66, %v87
  %v90 = vadd.f32 %v68, %v87
  %v91 = vadd.f32 %v71, %v87
  %v92 = vadd.f32 %v73, %v87
  %v93 = vadd.f32 %v76, %v87
  %v94 = vadd.f32 %v78, %v87
  %v95 = vadd.f32 %v81, %v87
  %v96 = vadd.f32 %v83, %v87
  %vm97 = vcmask 269568
  %v98 = vsel %vm97, %v66, -inf
  %v99 = vrot.slane %v98, 4
  %v100 = vmax.f32 %v98, %v99
  %v101 = vrot.slane %v100, 2
  %v102 = vmax.f32 %v100, %v101
  %v103 = vrot.slane %v102, 1
  %v104 = vmax.f32 %v102, %v103
  %v105 = vsel %vm97, %v68, -inf
  %v106 = vrot.slane %v105, 4
  %v107 = vmax.f32 %v105, %v106
  %v108 = vrot.slane %v107, 2
  %v109 = vmax.f32 %v107, %v108
  %v110 = vrot.slane %v109, 1
  %v111 = vmax.f32 %v109, %v110
  %v112 = vsel %vm97, %v71, -inf
  %v113 = vrot.slane %v112, 4
  %v114 = vmax.f32 %v112, %v113
  %v115 = vrot.slane %v114, 2
  %v116 = vmax.f32 %v114, %v115
  %v117 = vrot.slane %v116, 1
  %v118 = vmax.f32 %v116, %v117
  %v119 = vsel %vm97, %v73, -inf
  %v120 = vrot.slane %v119, 4
  %v121 = vmax.f32 %v119, %v120
  %v122 = vrot.slane %v121, 2
  %v123 = vmax.f32 %v121, %v122
  %v124 = vrot.slane %v123, 1
  %v125 = vmax.f32 %v123, %v124
  %v126 = vsel %vm97, %v76, -inf
  %v127 = vrot.slane %v126, 4
  %v128 = vmax.f32 %v126, %v127
  %v129 = vrot.slane %v128, 2
  %v130 = vmax.f32 %v128, %v129
  %v131 = vrot.slane %v130, 1
  %v132 = vmax.f32 %v130, %v131
  %v133 = vsel %vm97, %v78, -inf
  %v134 = vrot.slane %v133, 4
  %v135 = vmax.f32 %v133, %v134
  %v136 = vrot.slane %v135, 2
  %v137 = vmax.f32 %v135, %v136
  %v138 = vrot.slane %v137, 1
  %v139 = vmax.f32 %v137, %v138
  %v140 = vsel %vm97, %v81, -inf
  %v141 = vrot.slane %v140, 4
  %v142 = vmax.f32 %v140, %v141
  %v143 = vrot.slane %v142, 2
  %v144 = vmax.f32 %v142, %v143
  %v145 = vrot.slane %v144, 1
  %v146 = vmax.f32 %v144, %v145
  %v147 = vsel %vm97, %v83, -inf
  %v148 = vrot.slane %v147, 4
  %v149 = vmax.f32 %v147, %v148
  %v150 = vrot.slane %v149, 2
  %v151 = vmax.f32 %v149, %v150
  %v152 = vrot.slane %v151, 1
  %v153 = vmax.f32 %v151, %v152
  %v154 = vsub.f32 %v66, %v104
  %v155 = vsub.f32 %v68, %v111
  %v156 = vsub.f32 %v71, %v118
  %v157 = vsub.f32 %v73, %v125
  %v158 = vsub.f32 %v76, %v132
  %v159 = vsub.f32 %v78, %v139
  %v160 = vsub.f32 %v81, %v146
  %v161 = vsub.f32 %v83, %v153
  %v162 = vmul.f32 %v154, 1.442695
  %v163 = vpow.pop %v162
  %v164 = vmul.f32 %v155, 1.442695
  %v165 = vpow.pop %v164
  %v166 = vmul.f32 %v156, 1.442695
  %v167 = vpow.pop %v166
  %v168 = vmul.f32 %v157, 1.442695
  %v169 = vpow.pop %v168
  %v170 = vmul.f32 %v158, 1.442695
  %v171 = vpow.pop %v170
  %v172 = vmul.f32 %v159, 1.442695
  %v173 = vpow.pop %v172
  %v174 = vmul.f32 %v160, 1.442695
  %v175 = vpow.pop %v174
  %v176 = vmul.f32 %v161, 1.442695
  %v177 = vpow.pop %v176
  %v178 = vsel %vm97, %v163, 0.0
  %v179 = vrot.slane %v178, 4
  %v180 = vadd.f32 %v178, %v179
  %v181 = vrot.slane %v180, 2
  %v182 = vadd.f32 %v180, %v181
  %v183 = vrot.slane %v182, 1
  %v184 = vadd.f32 %v182, %v183
  %v185 = vsel %vm97, %v165, 0.0
  %v186 = vrot.slane %v185, 4
  %v187 = vadd.f32 %v185, %v186
  %v188 = vrot.slane %v187, 2
  %v189 = vadd.f32 %v187, %v188
  %v190 = vrot.slane %v189, 1
  %v191 = vadd.f32 %v189, %v190
  %v192 = vsel %vm97, %v167, 0.0
  %v193 = vrot.slane %v192, 4
  %v194 = vadd.f32 %v192, %v193
  %v195 = vrot.slane %v194, 2
  %v196 = vadd.f32 %v194, %v195
  %v197 = vrot.slane %v196, 1
  %v198 = vadd.f32 %v196, %v197
  %v199 = vsel %vm97, %v169, 0.0
  %v200 = vrot.slane %v199, 4
  %v201 = vadd.f32 %v199, %v200
  %v202 = vrot.slane %v201, 2
  %v203 = vadd.f32 %v201, %v202
  %v204 = vrot.slane %v203, 1
  %v205 = vadd.f32 %v203, %v204
  %v206 = vsel %vm97, %v171, 0.0
  %v207 = vrot.slane %v206, 4
  %v208 = vadd.f32 %v206, %v207
  %v209 = vrot.slane %v208, 2
  %v210 = vadd.f32 %v208, %v209
  %v211 = vrot.slane %v210, 1
  %v212 = vadd.f32 %v210, %v211
  %v213 = vsel %vm97, %v173, 0.0
  %v214 = vrot.slane %v213, 4
  %v215 = vadd.f32 %v213, %v214
  %v216 = vrot.slane %v215, 2
  %v217 = vadd.f32 %v215, %v216
  %v218 = vrot.slane %v217, 1
  %v219 = vadd.f32 %v217, %v218
  %v220 = vsel %vm97, %v175, 0.0
  %v221 = vrot.slane %v220, 4
  %v222 = vadd.f32 %v220, %v221
  %v223 = vrot.slane %v222, 2
  %v224 = vadd.f32 %v222, %v223
  %v225 = vrot.slane %v224, 1
  %v226 = vadd.f32 %v224, %v225
  %v227 = vsel %vm97, %v177, 0.0
  %v228 = vrot.slane %v227, 4
  %v229 = vadd.f32 %v227, %v228
  %v230 = vrot.slane %v229, 2
  %v231 = vadd.f32 %v229, %v230
  %v232 = vrot.slane %v231, 1
  %v233 = vadd.f32 %v231, %v232
  %v234 = vrcp.pop %v184
  %v235 = vrcp.pop %v191
  %v236 = vrcp.pop %v198
  %v237 = vrcp.pop %v205
  %v238 = vrcp.pop %v212
  %v239 = vrcp.pop %v219
  %v240 = vrcp.pop %v226
  %v241 = vrcp.pop %v233
  %v242 = vmul.f32 %v163, %v234
  %v243 = vmul.f32 %v165, %v235
  %v244 = vmul.f32 %v167, %v236
  %v245 = vmul.f32 %v169, %v237
  %v246 = vmul.f32 %v171, %v238
  %v247 = vmul.f32 %v173, %v239
  %v248 = vmul.f32 %v175, %v240
  %v249 = vmul.f32 %v177, %v241
  %251 = vset.pattern.permute.xlu0 32
  %252 = vperm.xlu0 %251, %v242
  %v253 = vpop.permute.xlu0 %252
  %256 = vset.pattern.permute.xlu0 32
  %257 = vperm.xlu0 %256, %v243
  %v258 = vpop.permute.xlu0 %257
  %261 = vset.pattern.permute.xlu0 32
  %262 = vperm.xlu0 %261, %v244
  %v263 = vpop.permute.xlu0 %262
  %266 = vset.pattern.permute.xlu0 32
  %267 = vperm.xlu0 %266, %v245
  %v268 = vpop.permute.xlu0 %267
  %271 = vset.pattern.permute.xlu0 32
  %272 = vperm.xlu0 %271, %v246
  %v273 = vpop.permute.xlu0 %272
  %276 = vset.pattern.permute.xlu0 32
  %277 = vperm.xlu0 %276, %v247
  %v278 = vpop.permute.xlu0 %277
  %281 = vset.pattern.permute.xlu0 32
  %282 = vperm.xlu0 %281, %v248
  %v283 = vpop.permute.xlu0 %282
  %286 = vset.pattern.permute.xlu0 32
  %287 = vperm.xlu0 %286, %v249
  %v288 = vpop.permute.xlu0 %287
  %v290 = vmul.f32 %v89, %v253
  %v291 = vmul.f32 %v90, %v258
  %v292 = vmul.f32 %v91, %v263
  %v293 = vmul.f32 %v92, %v268
  %v294 = vmul.f32 %v93, %v273
  %v295 = vmul.f32 %v94, %v278
  %v296 = vmul.f32 %v95, %v283
  %v297 = vmul.f32 %v96, %v288
  %298 = vst.msk [vmem:[%s3] sm:$0xff] %vm43, %v290
  %299 = vst.msk [vmem:[%s3 + $0x8] sm:$0xff] %vm43, %v291
  %300 = vst.msk [vmem:[%s3 + $0x10] sm:$0xff] %vm43, %v292
  %301 = vst.msk [vmem:[%s3 + $0x18] sm:$0xff] %vm43, %v293
  %302 = vst.msk [vmem:[%s3 + $0x20] sm:$0xff] %vm43, %v294
  %303 = vst.msk [vmem:[%s3 + $0x28] sm:$0xff] %vm43, %v295
  %304 = vst.msk [vmem:[%s3 + $0x30] sm:$0xff] %vm43, %v296
  %305 = vst.msk [vmem:[%s3 + $0x38] sm:$0xff] %vm43, %v297
  // Predicated region
  $region14: #{tpu_custom_call.1} parent=0 // pred_check
    _
  $region15: #{tpu_custom_call.1} parent=0 // pred_check_branch
    %307 = sbr.rel (0) target = $region17
  $region16: #{tpu_custom_call.1} parent=0 // pred_region
    _
  $region17: #{tpu_custom_call.1} parent=0 // pred_fallthru
    _
  // Predicated region
  $region18: #{tpu_custom_call.1} parent=0 // pred_check
    _
  $region19: #{tpu_custom_call.1} parent=0 // pred_check_branch
    %309 = sbr.rel (0) target = $region21
  $region20: #{tpu_custom_call.1} parent=0 // pred_region
    _
  $region21: #{tpu_custom_call.1} parent=0 // pred_fallthru
    _

</llo_original>
